<compile_context>
chip_gen: v5e
topology: v5e:2x2
jax: 0.10.0
libtpu: 0.0.40
codegen_flags: <defaults>
</compile_context>

<pallas_src>
import functools

import jax
import jax.numpy as jnp
from jax import lax
from jax.experimental import pallas as pl
from jax.experimental.pallas import tpu as pltpu

LANE = 128  # TPU lane width; the 2-wide output projection is padded to this.


def _bl1_column(b, ones_col):
    """L1 norm of b over dim 0, returned as a (batch, 1) column.

    The dim-0 contraction against a ones column folds the (n, batch)->(batch,)
    transpose into the MXU contraction (no materialized transpose).
    """
    return lax.dot_general(jnp.abs(b), ones_col,
                           dimension_numbers=(((0,), (0,)), ((), ())),
                           preferred_element_type=jnp.float32)  # (batch, 1)


def _cell_step(x, h, c, rows_ref, w_hh_t_ref, w_lll_t_ref, w_lin_pad_ref, dim):
    """One NormLSTMB step given the normalized scalar input x (batch, 1)."""
    # Packed row slab layout (see prepare_kernel_params):
    #   row 0: W_ih as a (1, 4*dim) row (in_features == 1)
    #   row 1: b_ih + b_hh folded gate bias
    #   row 2: b_lll in cols [:dim]
    #   row 3: b_lin padded into cols [:LANE] (cols >= 2 are zero)
    w_ih_row = rows_ref[0:1, :]                      # (1, 4*dim)
    b_gates = rows_ref[1:2, :]                       # (1, 4*dim)
    b_lll_row = rows_ref[2:3, :dim]                  # (1, dim)
    b_lin_row = rows_ref[3:4, :LANE]                 # (1, LANE)

    # Gates: x @ W_ih^T is a broadcasted outer product on the VPU (in=1);
    # the recurrent matmul runs bf16 on the MXU with f32 accumulation.
    gates = (x * w_ih_row
             + b_gates
             + jnp.dot(h.astype(jnp.bfloat16), w_hh_t_ref[...],
                       preferred_element_type=jnp.float32))     # (batch, 4*dim)

    i = jax.nn.sigmoid(gates[:, 0 * dim:1 * dim])
    f = jax.nn.sigmoid(gates[:, 1 * dim:2 * dim])
    g = jnp.tanh(gates[:, 2 * dim:3 * dim])
    o = jax.nn.sigmoid(gates[:, 3 * dim:4 * dim])

    c_new = f * c + i * g                            # (batch, dim) f32
    h_new = o * jnp.tanh(c_new)                      # (batch, dim) f32

    # out = softplus(linear(relu(lll(c_new)))) -- PyTorch feeds the NEW cellstate.
    z = jnp.maximum(
        jnp.dot(c_new.astype(jnp.bfloat16), w_lll_t_ref[...],
                preferred_element_type=jnp.float32) + b_lll_row, 0.0)
    pre = (jnp.dot(z.astype(jnp.bfloat16), w_lin_pad_ref[...],
                   preferred_element_type=jnp.float32)
           + b_lin_row)                              # (batch, LANE); cols >= 2 padded
    # nn.Softplus(beta=1, threshold=20)
    out_pad = jnp.where(pre > 20.0, pre,
                        jnp.log1p(jnp.exp(jnp.minimum(pre, 20.0))))
    return out_pad, h_new, c_new


def norm_lstmb_kernel(b_ref, h_ref, c_ref, rows_ref, w_hh_t_ref,
                      w_lll_t_ref, w_lin_pad_ref,
                      out_pad_ref, h_out_ref, c_out_ref, *, dim):
    b = b_ref[...]                                   # (n, batch) f32, native layout
    n, batch = b.shape
    ones_col = jnp.ones((n, 1), jnp.float32)

    bl1 = _bl1_column(b, ones_col)                   # (batch, 1)
    # First-call normalizer semantics: batch statistics, unbiased std (ddof=1).
    # (batch == 1 or constant bl1 would NaN exactly like torch.std() does.)
    mean = jnp.mean(bl1)
    var = jnp.sum((bl1 - mean) ** 2) / (batch - 1)
    x = (bl1 - mean) * lax.rsqrt(var)                # (batch, 1)

    out_pad, h_new, c_new = _cell_step(x, h_ref[...], c_ref[...], rows_ref,
                                       w_hh_t_ref, w_lll_t_ref, w_lin_pad_ref, dim)
    out_pad_ref[...] = out_pad
    h_out_ref[...] = h_new
    c_out_ref[...] = c_new


def norm_lstmb_seq_kernel(b_seq_ref, h0_ref, c0_ref, rows_ref, w_hh_t_ref,
                          w_lll_t_ref, w_lin_pad_ref,
                          out_seq_ref, h_out_ref, c_out_ref,
                          h_scr, c_scr, *, dim):
    """T timesteps fused into one kernel: weights stay resident in VMEM,
    h/c carried in VMEM scratch, per-step outputs written to out_seq_ref."""
    T, n, batch = b_seq_ref.shape
    ones_col = jnp.ones((n, 1), jnp.float32)

    # First-call normalizer semantics: stats frozen from timestep 0 and reused
    # for every step (mirrors torch's initialized_normalizers behavior).
    bl1_0 = _bl1_column(b_seq_ref[0], ones_col)
    mean = jnp.mean(bl1_0)
    inv_std = lax.rsqrt(jnp.sum((bl1_0 - mean) ** 2) / (batch - 1))

    h_scr[...] = h0_ref[...]
    c_scr[...] = c0_ref[...]

    @pl.loop(0, T)
    def _(t):
        bl1 = _bl1_column(b_seq_ref[t], ones_col)
        x = (bl1 - mean) * inv_std
        out_t, h_new, c_new = _cell_step(x, h_scr[...], c_scr[...], rows_ref,
                                         w_hh_t_ref, w_lll_t_ref, w_lin_pad_ref, dim)
        out_seq_ref[t] = out_t
        h_scr[...] = h_new
        c_scr[...] = c_new

    h_out_ref[...] = h_scr[...]
    c_out_ref[...] = c_scr[...]


def prepare_kernel_params(params, dim):
    """One-time layout prep: transposes, bias folding, lane padding, bf16 casts,
    and packing of all tiny row operands into a single (4, 4*dim) slab so the
    per-call path has zero glue XLA ops and the kernel entry needs fewer DMAs."""
    rows = jnp.zeros((4, 4 * dim), jnp.float32)
    rows = rows.at[0, :].set(params["w_ih"].reshape(4 * dim).astype(jnp.float32))
    rows = rows.at[1, :].set((params["b_ih"] + params["b_hh"]).astype(jnp.float32))
    rows = rows.at[2, :dim].set(params["b_lll"].astype(jnp.float32))
    rows = rows.at[3, :2].set(params["b_lin"].astype(jnp.float32))

    w_lin_pad = (jnp.zeros((dim, LANE), jnp.float32)
                 .at[:, :2].set(params["w_lin"].T)
                 .astype(jnp.bfloat16))                              # (dim, LANE) bf16
    return {
        "rows": rows,                                                # (4, 4*dim) f32
        "w_hh_t": params["w_hh"].T.astype(jnp.bfloat16),             # (dim, 4*dim)
        "w_lll_t": params["w_lll"].T.astype(jnp.bfloat16),           # (dim, dim)
        "w_lin_pad": w_lin_pad,                                      # (dim, LANE)
    }


def norm_lstmb_forward(b, c_unused, hidden, cellstate, kparams, *, dim):
    """Single step. b: (n, batch) float32 (native PyTorch layout)."""
    del c_unused  # unused by the PyTorch module as well
    n, batch = b.shape
    inputs = (b, hidden, cellstate, kparams["rows"], kparams["w_hh_t"],
              kparams["w_lll_t"], kparams["w_lin_pad"])
    vmem = pl.BlockSpec(memory_space=pltpu.MemorySpace.VMEM)
    out_pad, h_new, c_new = pl.pallas_call(
        functools.partial(norm_lstmb_kernel, dim=dim),
        in_specs=[vmem] * len(inputs),
        out_specs=(vmem, vmem, vmem),
        out_shape=(jax.ShapeDtypeStruct((batch, LANE), jnp.float32),
                   jax.ShapeDtypeStruct((batch, dim), jnp.float32),
                   jax.ShapeDtypeStruct((batch, dim), jnp.float32)),
        input_output_aliases={1: 1, 2: 2},   # hidden->h_out, cellstate->c_out
    )(*inputs)
    # Kernel stores a lane-dense (batch, 128) slab; the real output is cols [:2].
    return out_pad[:, :2], h_new, c_new


def norm_lstmb_sequence(b_seq, hidden, cellstate, kparams, *, dim):
    """Fused T-step variant. b_seq: (T, n, batch) float32."""
    T, n, batch = b_seq.shape
    inputs = (b_seq, hidden, cellstate, kparams["rows"], kparams["w_hh_t"],
              kparams["w_lll_t"], kparams["w_lin_pad"])
    vmem = pl.BlockSpec(memory_space=pltpu.MemorySpace.VMEM)
    out_seq, h_new, c_new = pl.pallas_call(
        functools.partial(norm_lstmb_seq_kernel, dim=dim),
        in_specs=[vmem] * len(inputs),
        out_specs=(vmem, vmem, vmem),
        out_shape=(jax.ShapeDtypeStruct((T, batch, LANE), jnp.float32),
                   jax.ShapeDtypeStruct((batch, dim), jnp.float32),
                   jax.ShapeDtypeStruct((batch, dim), jnp.float32)),
        scratch_shapes=[pltpu.VMEM((batch, dim), jnp.float32),   # h carry
                        pltpu.VMEM((batch, dim), jnp.float32)],  # c carry
        input_output_aliases={1: 1, 2: 2},
    )(*inputs)
    return out_seq[:, :, :2], h_new, c_new


def init_params(key, dim):
    ks = jax.random.split(key, 10)
    scale = 0.1
    return {
        "w_ih": scale * jax.random.normal(ks[0], (4 * dim, 1), jnp.float32),
        "w_hh": scale * jax.random.normal(ks[1], (4 * dim, dim), jnp.float32),
        "b_ih": scale * jax.random.normal(ks[2], (4 * dim,), jnp.float32),
        "b_hh": scale * jax.random.normal(ks[3], (4 * dim,), jnp.float32),
        "w_lll": scale * jax.random.normal(ks[4], (dim, dim), jnp.float32),
        "b_lll": scale * jax.random.normal(ks[5], (dim,), jnp.float32),
        "w_lin": scale * jax.random.normal(ks[6], (2, dim), jnp.float32),
        "b_lin": scale * jax.random.normal(ks[7], (2,), jnp.float32),
        # nn.Parameter hidden / cellstate (used by get_initial)
        "hidden0": jax.random.normal(ks[8], (dim,), jnp.float32),
        "cell0": jax.random.normal(ks[9], (dim,), jnp.float32),
    }


if __name__ == "__main__":
    dim = 128          # module default
    batch = 8          # number of columns of b (batch fed to the LSTM cell)
    n = 16             # reduction length of the L1 norm (dim 0 of b)
    T = 4              # timesteps for the fused-sequence demo

    key = jax.random.PRNGKey(0)
    kp, kb, kc, ks = jax.random.split(key, 4)
    params = init_params(kp, dim)
    kparams = prepare_kernel_params(params, dim)     # one-time layout prep

    b = jax.random.normal(kb, (n, batch), jnp.float32)       # PyTorch layout (n, batch)
    c_arg = jax.random.normal(kc, (n, batch), jnp.float32)   # unused, mirrors signature

    # get_initial(batch): repeat the learned hidden / cellstate parameters.
    hidden = jnp.broadcast_to(params["hidden0"][None, :], (batch, dim)).astype(jnp.float32)
    cellstate = jnp.broadcast_to(params["cell0"][None, :], (batch, dim)).astype(jnp.float32)

    # --- single step (the module's forward) ---------------------------------
    fwd = jax.jit(functools.partial(norm_lstmb_forward, dim=dim),
                  donate_argnums=(2, 3))             # donate recurrent state
    out, h_new, c_new = fwd(b, c_arg, hidden, cellstate, kparams)
    jax.block_until_ready((out, h_new, c_new))

    assert out.shape == (batch, 2)
    assert h_new.shape == (batch, dim)
    assert c_new.shape == (batch, dim)
    assert bool(jnp.all(jnp.isfinite(out)))
    assert bool(jnp.all(jnp.isfinite(h_new)))
    assert bool(jnp.all(jnp.isfinite(c_new)))

    # --- fused T-step variant (weights resident, state carried in VMEM) -----
    b_seq = jax.random.normal(ks, (T, n, batch), jnp.float32)
    hidden_s = jnp.broadcast_to(params["hidden0"][None, :], (batch, dim)).astype(jnp.float32)
    cell_s = jnp.broadcast_to(params["cell0"][None, :], (batch, dim)).astype(jnp.float32)

    seq_fwd = jax.jit(functools.partial(norm_lstmb_sequence, dim=dim),
                      donate_argnums=(1, 2))
    out_seq, h_T, c_T = seq_fwd(b_seq, hidden_s, cell_s, kparams)
    jax.block_until_ready((out_seq, h_T, c_T))

    assert out_seq.shape == (T, batch, 2)
    assert h_T.shape == (batch, dim)
    assert c_T.shape == (batch, dim)
    assert bool(jnp.all(jnp.isfinite(out_seq)))
    assert bool(jnp.all(jnp.isfinite(h_T)))
    assert bool(jnp.all(jnp.isfinite(c_T)))

    print("KERNEL_OK")
</pallas_src>

<mosaic_0001>
module attributes {stable_mosaic.version = 11 : i64} {
  func.func @norm_lstmb_kernel(%arg0: memref<16x8xf32, #tpu.memory_space<vmem>>, %arg1: memref<8x128xf32, #tpu.memory_space<vmem>>, %arg2: memref<8x128xf32, #tpu.memory_space<vmem>>, %arg3: memref<4x512xf32, #tpu.memory_space<vmem>>, %arg4: memref<128x512xbf16, #tpu.memory_space<vmem>>, %arg5: memref<128x128xbf16, #tpu.memory_space<vmem>>, %arg6: memref<128x128xbf16, #tpu.memory_space<vmem>>, %arg7: memref<8x128xf32, #tpu.memory_space<vmem>>, %arg8: memref<8x128xf32, #tpu.memory_space<vmem>>, %arg9: memref<8x128xf32, #tpu.memory_space<vmem>>) attributes {dimension_semantics = [], scalar_prefetch = 0 : i64, scratch_operands = 0 : i64, tpu.core_type = #tpu.core_type<tc>} {
    %c0 = arith.constant 0 : index
    %c0_0 = arith.constant 0 : index
    %0 = vector.load %arg0[%c0, %c0_0] : memref<16x8xf32, #tpu.memory_space<vmem>>, vector<16x8xf32>
    %cst = arith.constant 1.000000e+00 : f32
    %1 = vector.broadcast %cst : f32 to vector<16x1xf32>
    %2 = math.absf %0 : vector<16x8xf32>
    %cst_1 = arith.constant dense<0.000000e+00> : vector<8x1xf32>
    %3 = tpu.matmul %2, %1, %cst_1 {dimension_numbers = #tpu.dot_dimension_numbers<[0], [0], [1], [1], [0, 1, 1, 1], [], []>} : vector<16x8xf32>, vector<16x1xf32>, vector<8x1xf32> -> vector<8x1xf32>
    %4 = vector.shape_cast %3 : vector<8x1xf32> to vector<1x8x1xf32>
    %cst_2 = arith.constant dense<0.000000e+00> : vector<1xf32>
    %5 = vector.multi_reduction <add>, %4, %cst_2 [1, 2] : vector<1x8x1xf32> to vector<1xf32>
    %6 = vector.shape_cast %5 : vector<1xf32> to vector<1x1x1xf32>
    %7 = vector.extract %6[0, 0, 0] : f32 from vector<1x1x1xf32>
    %cst_3 = arith.constant 8.000000e+00 : f32
    %8 = arith.divf %7, %cst_3 : f32
    %9 = vector.broadcast %8 : f32 to vector<8x1xf32>
    %10 = arith.subf %3, %9 : vector<8x1xf32>
    %11 = arith.mulf %10, %10 : vector<8x1xf32>
    %12 = vector.shape_cast %11 : vector<8x1xf32> to vector<1x8x1xf32>
    %cst_4 = arith.constant dense<0.000000e+00> : vector<1xf32>
    %13 = vector.multi_reduction <add>, %12, %cst_4 [1, 2] : vector<1x8x1xf32> to vector<1xf32>
    %14 = vector.shape_cast %13 : vector<1xf32> to vector<1x1x1xf32>
    %15 = vector.extract %14[0, 0, 0] : f32 from vector<1x1x1xf32>
    %cst_5 = arith.constant 7.000000e+00 : f32
    %16 = arith.divf %15, %cst_5 : f32
    %17 = vector.broadcast %8 : f32 to vector<8x1xf32>
    %18 = arith.subf %3, %17 : vector<8x1xf32>
    %19 = math.rsqrt %16 : f32
    %20 = vector.broadcast %19 : f32 to vector<8x1xf32>
    %21 = arith.mulf %18, %20 : vector<8x1xf32>
    %c0_6 = arith.constant 0 : index
    %c0_7 = arith.constant 0 : index
    %22 = vector.load %arg1[%c0_6, %c0_7] : memref<8x128xf32, #tpu.memory_space<vmem>>, vector<8x128xf32>
    %c0_8 = arith.constant 0 : index
    %c0_9 = arith.constant 0 : index
    %23 = vector.load %arg2[%c0_8, %c0_9] : memref<8x128xf32, #tpu.memory_space<vmem>>, vector<8x128xf32>
    %c0_10 = arith.constant 0 : index
    %c0_11 = arith.constant 0 : index
    %24 = vector.load %arg3[%c0_10, %c0_11] : memref<4x512xf32, #tpu.memory_space<vmem>>, vector<1x512xf32>
    %c1 = arith.constant 1 : index
    %c0_12 = arith.constant 0 : index
    %25 = vector.load %arg3[%c1, %c0_12] : memref<4x512xf32, #tpu.memory_space<vmem>>, vector<1x512xf32>
    %c2 = arith.constant 2 : index
    %c0_13 = arith.constant 0 : index
    %26 = vector.load %arg3[%c2, %c0_13] : memref<4x512xf32, #tpu.memory_space<vmem>>, vector<1x128xf32>
    %c3 = arith.constant 3 : index
    %c0_14 = arith.constant 0 : index
    %27 = vector.load %arg3[%c3, %c0_14] : memref<4x512xf32, #tpu.memory_space<vmem>>, vector<1x128xf32>
    %28 = vector.broadcast %21 : vector<8x1xf32> to vector<8x512xf32>
    %29 = vector.broadcast %24 : vector<1x512xf32> to vector<8x512xf32>
    %30 = arith.mulf %28, %29 : vector<8x512xf32>
    %31 = vector.broadcast %25 : vector<1x512xf32> to vector<8x512xf32>
    %32 = arith.addf %30, %31 : vector<8x512xf32>
    %33 = arith.truncf %22 : vector<8x128xf32> to vector<8x128xbf16>
    %c0_15 = arith.constant 0 : index
    %c0_16 = arith.constant 0 : index
    %34 = vector.load %arg4[%c0_15, %c0_16] : memref<128x512xbf16, #tpu.memory_space<vmem>>, vector<128x512xbf16>
    %cst_17 = arith.constant dense<0.000000e+00> : vector<8x512xf32>
    %35 = tpu.matmul %33, %34, %cst_17 {dimension_numbers = #tpu.dot_dimension_numbers<[1], [0], [0], [1], [0, 0, 1, 1], [], []>} : vector<8x128xbf16>, vector<128x512xbf16>, vector<8x512xf32> -> vector<8x512xf32>
    %36 = arith.addf %32, %35 : vector<8x512xf32>
    %37 = vector.extract_strided_slice %36 {offsets = [0, 0], sizes = [8, 128], strides = [1, 1]} : vector<8x512xf32> to vector<8x128xf32>
    %38 = arith.negf %37 : vector<8x128xf32>
    %39 = math.exp %38 : vector<8x128xf32>
    %cst_18 = arith.constant 1.000000e+00 : f32
    %40 = vector.broadcast %cst_18 : f32 to vector<8x128xf32>
    %41 = arith.addf %40, %39 : vector<8x128xf32>
    %42 = arith.divf %40, %41 : vector<8x128xf32>
    %43 = vector.extract_strided_slice %36 {offsets = [0, 128], sizes = [8, 128], strides = [1, 1]} : vector<8x512xf32> to vector<8x128xf32>
    %44 = arith.negf %43 : vector<8x128xf32>
    %45 = math.exp %44 : vector<8x128xf32>
    %cst_19 = arith.constant 1.000000e+00 : f32
    %46 = vector.broadcast %cst_19 : f32 to vector<8x128xf32>
    %47 = arith.addf %46, %45 : vector<8x128xf32>
    %48 = arith.divf %46, %47 : vector<8x128xf32>
    %49 = vector.extract_strided_slice %36 {offsets = [0, 256], sizes = [8, 128], strides = [1, 1]} : vector<8x512xf32> to vector<8x128xf32>
    %50 = math.tanh %49 : vector<8x128xf32>
    %51 = vector.extract_strided_slice %36 {offsets = [0, 384], sizes = [8, 128], strides = [1, 1]} : vector<8x512xf32> to vector<8x128xf32>
    %52 = arith.negf %51 : vector<8x128xf32>
    %53 = math.exp %52 : vector<8x128xf32>
    %cst_20 = arith.constant 1.000000e+00 : f32
    %54 = vector.broadcast %cst_20 : f32 to vector<8x128xf32>
    %55 = arith.addf %54, %53 : vector<8x128xf32>
    %56 = arith.divf %54, %55 : vector<8x128xf32>
    %57 = arith.mulf %48, %23 : vector<8x128xf32>
    %58 = arith.mulf %42, %50 : vector<8x128xf32>
    %59 = arith.addf %57, %58 : vector<8x128xf32>
    %60 = math.tanh %59 : vector<8x128xf32>
    %61 = arith.mulf %56, %60 : vector<8x128xf32>
    %62 = arith.truncf %59 : vector<8x128xf32> to vector<8x128xbf16>
    %c0_21 = arith.constant 0 : index
    %c0_22 = arith.constant 0 : index
    %63 = vector.load %arg5[%c0_21, %c0_22] : memref<128x128xbf16, #tpu.memory_space<vmem>>, vector<128x128xbf16>
    %cst_23 = arith.constant dense<0.000000e+00> : vector<8x128xf32>
    %64 = tpu.matmul %62, %63, %cst_23 {dimension_numbers = #tpu.dot_dimension_numbers<[1], [0], [0], [1], [0, 0, 1, 1], [], []>} : vector<8x128xbf16>, vector<128x128xbf16>, vector<8x128xf32> -> vector<8x128xf32>
    %65 = vector.broadcast %26 : vector<1x128xf32> to vector<8x128xf32>
    %66 = arith.addf %64, %65 : vector<8x128xf32>
    %cst_24 = arith.constant 0.000000e+00 : f32
    %67 = vector.broadcast %cst_24 : f32 to vector<8x128xf32>
    %68 = arith.maximumf %66, %67 : vector<8x128xf32>
    %69 = arith.truncf %68 : vector<8x128xf32> to vector<8x128xbf16>
    %c0_25 = arith.constant 0 : index
    %c0_26 = arith.constant 0 : index
    %70 = vector.load %arg6[%c0_25, %c0_26] : memref<128x128xbf16, #tpu.memory_space<vmem>>, vector<128x128xbf16>
    %cst_27 = arith.constant dense<0.000000e+00> : vector<8x128xf32>
    %71 = tpu.matmul %69, %70, %cst_27 {dimension_numbers = #tpu.dot_dimension_numbers<[1], [0], [0], [1], [0, 0, 1, 1], [], []>} : vector<8x128xbf16>, vector<128x128xbf16>, vector<8x128xf32> -> vector<8x128xf32>
    %72 = vector.broadcast %27 : vector<1x128xf32> to vector<8x128xf32>
    %73 = arith.addf %71, %72 : vector<8x128xf32>
    %cst_28 = arith.constant 2.000000e+01 : f32
    %74 = vector.broadcast %cst_28 : f32 to vector<8x128xf32>
    %75 = arith.cmpf ogt, %73, %74 : vector<8x128xf32>
    %cst_29 = arith.constant 2.000000e+01 : f32
    %76 = vector.broadcast %cst_29 : f32 to vector<8x128xf32>
    %77 = arith.minimumf %73, %76 : vector<8x128xf32>
    %78 = math.exp %77 : vector<8x128xf32>
    %79 = math.log1p %78 : vector<8x128xf32>
    %80 = arith.select %75, %73, %79 : vector<8x128xi1>, vector<8x128xf32>
    %c0_30 = arith.constant 0 : index
    %c0_31 = arith.constant 0 : index
    %81 = vector.load %arg7[%c0_30, %c0_31] : memref<8x128xf32, #tpu.memory_space<vmem>>, vector<8x128xf32>
    tpu.vector_store %arg7[%c0_30, %c0_31], %80 {strides = array<i32>} : memref<8x128xf32, #tpu.memory_space<vmem>>, vector<8x128xf32>,
    %c0_32 = arith.constant 0 : index
    %c0_33 = arith.constant 0 : index
    %82 = vector.load %arg8[%c0_32, %c0_33] : memref<8x128xf32, #tpu.memory_space<vmem>>, vector<8x128xf32>
    tpu.vector_store %arg8[%c0_32, %c0_33], %61 {strides = array<i32>} : memref<8x128xf32, #tpu.memory_space<vmem>>, vector<8x128xf32>,
    %c0_34 = arith.constant 0 : index
    %c0_35 = arith.constant 0 : index
    %83 = vector.load %arg9[%c0_34, %c0_35] : memref<8x128xf32, #tpu.memory_space<vmem>>, vector<8x128xf32>
    tpu.vector_store %arg9[%c0_34, %c0_35], %59 {strides = array<i32>} : memref<8x128xf32, #tpu.memory_space<vmem>>, vector<8x128xf32>,
    return
  }
}

</mosaic_0001>

<llo_original>
// kernel: norm_lstmb_forward.1
$region0: #{norm_lstmb_forward.1}
  #allocation0 [shape = 'u32[]', space=smem, size = 0x4, offset = 0x4, fixed_abs, tag = 'smem constant byte address 0x4 - core index']
  #allocation1 [shape = 'u32[72,128]{1,0:T(1,128)}', space=vmem, size = 0x9000, scoped, tag = 'internal scratch']
  %s0 = inlined_call_operand.vmem [shape: f32[16,8], index: 0, kind: input, shape index: {}]
  %s1 = inlined_call_operand.vmem [shape: f32[8,128], index: 1, kind: input, shape index: {}, may-alias: {1,8}]
  %s2 = inlined_call_operand.vmem [shape: f32[8,128], index: 2, kind: input, shape index: {}, may-alias: {2,9}]
  %s3 = inlined_call_operand.hbm [shape: f32[4,512], index: 3, kind: input, shape index: {}]
  %s4 = inlined_call_operand.hbm [shape: bf16[128,512], index: 4, kind: input, shape index: {}]
  %s5 = inlined_call_operand.hbm [shape: bf16[128,128], index: 5, kind: input, shape index: {}]
  %s6 = inlined_call_operand.hbm [shape: bf16[128,128], index: 6, kind: input, shape index: {}]
  %s7 = inlined_call_operand.vmem [shape: f32[8,128], index: 7, kind: output, shape index: {0}]
  %s8 = inlined_call_operand.vmem [shape: f32[8,128], index: 8, kind: output, shape index: {1}, may-alias: {1,8}]
  %s9 = inlined_call_operand.vmem [shape: f32[8,128], index: 9, kind: output, shape index: {2}, may-alias: {2,9}]
  %10 = xla_tuple %s7, %s8, %s9
  %s11 = sld [smem:[#allocation0]]
  $region70: #{norm_lstmb_forward.1} parent=0
    _
  %s13 = ssub.s32 1, %s11
  %s14 = scalar_select 0, %s13, %s11
  $region1: #{norm_lstmb_forward.1} parent=0
    #allocation2 [shape = 'u8[8192]{0}', space=vmem, size = 0x2000, scoped, tag = 'input window, operand 3, single buffered']
    #allocation3 [shape = 's32[1]{0}', space=sflag, size = 0x4, scoped, tag = 'scoped memory for norm_lstmb_forward.1']
    #allocation4 [shape = 'u8[131072]{0}', space=vmem, size = 0x20000, scoped, tag = 'input window, operand 4, single buffered']
    #allocation5 [shape = 's32[1]{0}', space=sflag, size = 0x4, scoped, tag = 'scoped memory for norm_lstmb_forward.1']
    #allocation6 [shape = 'u8[32768]{0}', space=vmem, size = 0x8000, scoped, tag = 'input window, operand 5, single buffered']
    #allocation7 [shape = 'u8[32768]{0}', space=vmem, size = 0x8000, scoped, tag = 'input window, operand 6, single buffered']
    #allocation8 [shape = 's32[1]{0}', space=sflag, size = 0x4, scoped, tag = 'scoped memory for norm_lstmb_forward.1']
    %15 = vsyncpa [#allocation3], 0
    %16 = vsyncpa [#allocation5], 0
    %17 = vsyncpa [#allocation8], 0
    // Predicated region
    $region2: #{norm_lstmb_forward.1} parent=1 // pred_check
      _
    $region3: #{norm_lstmb_forward.1} parent=1 // pred_check_branch
      %19 = sbr.rel (0) target = $region5
    $region4: #{norm_lstmb_forward.1} parent=1 // pred_region
      _
    $region5: #{norm_lstmb_forward.1} parent=1 // pred_fallthru
      _
    // Predicated region
    $region6: #{norm_lstmb_forward.1} parent=1 // pred_check
      _
    $region7: #{norm_lstmb_forward.1} parent=1 // pred_check_branch
      %21 = sbr.rel (0) target = $region9
    $region8: #{norm_lstmb_forward.1} parent=1 // pred_region
      _
    $region9: #{norm_lstmb_forward.1} parent=1 // pred_fallthru
      _
    // Predicated region
    $region10: #{norm_lstmb_forward.1} parent=1 // pred_check
      _
    $region11: #{norm_lstmb_forward.1} parent=1 // pred_check_branch
      %23 = sbr.rel (0) target = $region13
    $region12: #{norm_lstmb_forward.1} parent=1 // pred_region
      _
    $region13: #{norm_lstmb_forward.1} parent=1 // pred_fallthru
      _
    // Predicated region
    $region14: #{norm_lstmb_forward.1} parent=1 // pred_check
      _
    $region15: #{norm_lstmb_forward.1} parent=1 // pred_check_branch
      %25 = sbr.rel (0) target = $region17
    $region16: #{norm_lstmb_forward.1} parent=1 // pred_region
      %27 = vsyncadd [#allocation3], 0
      %s29 = sshll.u32 %s3, 4
      %s30 = int_to_ptr.hbm [resolvable:$true] %s29
      %s31 = sshll.u32 [#allocation2], 4
      %s32 = int_to_ptr.vmem [resolvable:$true] %s31
      %34 = dma.hbm_to_vmem [thread:$0]  %s30, 256, %s32, [#allocation3]
    $region17: #{norm_lstmb_forward.1} parent=1 // pred_fallthru
      _
    // Predicated region
    $region18: #{norm_lstmb_forward.1} parent=1 // pred_check
      _
    $region19: #{norm_lstmb_forward.1} parent=1 // pred_check_branch
      %36 = sbr.rel (0) target = $region21
    $region20: #{norm_lstmb_forward.1} parent=1 // pred_region
      %38 = vsyncadd [#allocation5], 0
      %s39 = sshll.u32 %s4, 4
      %s40 = int_to_ptr.hbm [resolvable:$true] %s39
      %s41 = sshll.u32 [#allocation4], 4
      %s42 = int_to_ptr.vmem [resolvable:$true] %s41
      %47 = dma.hbm_to_vmem [thread:$0]  %s40, 4096, %s42, [#allocation5], 256, 256, 16
    $region21: #{norm_lstmb_forward.1} parent=1 // pred_fallthru
      _
    // Predicated region
    $region22: #{norm_lstmb_forward.1} parent=1 // pred_check
      _
    $region23: #{norm_lstmb_forward.1} parent=1 // pred_check_branch
      %49 = sbr.rel (0) target = $region25
    $region24: #{norm_lstmb_forward.1} parent=1 // pred_region
      %51 = vsyncadd [#allocation5], 0
      %s52 = sshll.u32 %s5, 4
      %s53 = int_to_ptr.hbm [resolvable:$true] %s52
      %s54 = sshll.u32 [#allocation6], 4
      %s55 = int_to_ptr.vmem [resolvable:$true] %s54
      %60 = dma.hbm_to_vmem [thread:$0]  %s53, 1024, %s55, [#allocation5], 64, 64, 4
    $region25: #{norm_lstmb_forward.1} parent=1 // pred_fallthru
      _
    // Predicated region
    $region26: #{norm_lstmb_forward.1} parent=1 // pred_check
      _
    $region27: #{norm_lstmb_forward.1} parent=1 // pred_check_branch
      %62 = sbr.rel (0) target = $region29
    $region28: #{norm_lstmb_forward.1} parent=1 // pred_region
      %64 = vsyncadd [#allocation8], 0
      %s65 = sshll.u32 %s6, 4
      %s66 = int_to_ptr.hbm [resolvable:$true] %s65
      %s67 = sshll.u32 [#allocation7], 4
      %s68 = int_to_ptr.vmem [resolvable:$true] %s67
      %73 = dma.hbm_to_vmem [thread:$0]  %s66, 1024, %s68, [#allocation8], 64, 64, 4
    $region29: #{norm_lstmb_forward.1} parent=1 // pred_fallthru
      _
    // Predicated region
    $region30: #{norm_lstmb_forward.1} parent=1 // pred_check
      _
    $region31: #{norm_lstmb_forward.1} parent=1 // pred_check_branch
      %75 = sbr.rel (0) target = $region33
    $region32: #{norm_lstmb_forward.1} parent=1 // pred_region
      %77 = dma.done [#allocation3], 256
    $region33: #{norm_lstmb_forward.1} parent=1 // pred_fallthru
      _
    // Predicated region
    $region34: #{norm_lstmb_forward.1} parent=1 // pred_check
      _
    $region35: #{norm_lstmb_forward.1} parent=1 // pred_check_branch
      %79 = sbr.rel (0) target = $region37
    $region36: #{norm_lstmb_forward.1} parent=1 // pred_region
      %81 = dma.done [#allocation5], 4096
    $region37: #{norm_lstmb_forward.1} parent=1 // pred_fallthru
      _
    // Predicated region
    $region38: #{norm_lstmb_forward.1} parent=1 // pred_check
      _
    $region39: #{norm_lstmb_forward.1} parent=1 // pred_check_branch
      %83 = sbr.rel (0) target = $region41
    $region40: #{norm_lstmb_forward.1} parent=1 // pred_region
      %85 = dma.done [#allocation5], 1024
    $region41: #{norm_lstmb_forward.1} parent=1 // pred_fallthru
      _
    // Predicated region
    $region42: #{norm_lstmb_forward.1} parent=1 // pred_check
      _
    $region43: #{norm_lstmb_forward.1} parent=1 // pred_check_branch
      %87 = sbr.rel (0) target = $region45
    $region44: #{norm_lstmb_forward.1} parent=1 // pred_region
      %89 = dma.done [#allocation8], 1024
    $region45: #{norm_lstmb_forward.1} parent=1 // pred_fallthru
      _
    %v90 = vld [vmem:[%s0] sm:$0xff]
    %v91 = vld [vmem:[%s0 + $0x8] sm:$0xff]
    %v92 = vand.u32 2147483647, %v90
    %v93 = vand.u32 2147483647, %v91
    %94 = vxpose.xlu0.b32.start [1/16] %v92, 128
    %95 = vxpose.xlu0.b32.cont [2/16] %v93, 128
    %96 = vxpose.xlu0.b32.cont [3/16] 0.0, 128
    %97 = vxpose.xlu0.b32.cont [4/16] 0.0, 128
    %98 = vxpose.xlu0.b32.cont [5/16] 0.0, 128
    %99 = vxpose.xlu0.b32.cont [6/16] 0.0, 128
    %100 = vxpose.xlu0.b32.cont [7/16] 0.0, 128
    %101 = vxpose.xlu0.b32.cont [8/16] 0.0, 128
    %102 = vxpose.xlu0.b32.cont [9/16] 0.0, 128
    %103 = vxpose.xlu0.b32.cont [10/16] 0.0, 128
    %104 = vxpose.xlu0.b32.cont [11/16] 0.0, 128
    %105 = vxpose.xlu0.b32.cont [12/16] 0.0, 128
    %106 = vxpose.xlu0.b32.cont [13/16] 0.0, 128
    %107 = vxpose.xlu0.b32.cont [14/16] 0.0, 128
    %108 = vxpose.xlu0.b32.cont [15/16] 0.0, 128
    %109 = vxpose.xlu0.b32.end [16/16] 0.0, 128
    %v110 = vpop.trf.xlu0
    %v111 = vpop.trf.xlu0
    %v112 = vpop.trf.xlu0
    %v113 = vpop.trf.xlu0
    %v114 = vpop.trf.xlu0
    %v115 = vpop.trf.xlu0
    %v116 = vpop.trf.xlu0
    %v117 = vpop.trf.xlu0
    %v118 = vpop.trf.xlu0
    %v119 = vpop.trf.xlu0
    %v120 = vpop.trf.xlu0
    %v121 = vpop.trf.xlu0
    %v122 = vpop.trf.xlu0
    %v123 = vpop.trf.xlu0
    %v124 = vpop.trf.xlu0
    %v125 = vpop.trf.xlu0
    %vm126 = vcmask 130048
    %v128 = vsel %vm126, %v110, 0
    %130 = vmatpush.msra.mxu0 0.0
    %131 = vmatpush.msra.mxu0 0.0
    %132 = vmatpush.msra.mxu0 0.0
    %133 = vmatpush.msra.mxu0 0.0
    %134 = vmatpush.msra.mxu0 0.0
    %135 = vmatpush.msra.mxu0 0.0
    %136 = vmatpush.msra.mxu0 0.0
    %137 = vmatpush.msra.mxu0 0.0
    %138 = vmatpush.msra.mxu0 0.0
    %139 = vmatpush.msra.mxu0 0.0
    %140 = vmatpush.msra.mxu0 0.0
    %141 = vmatpush.msra.mxu0 0.0
    %142 = vmatpush.msra.mxu0 0.0
    %143 = vmatpush.msra.mxu0 0.0
    %144 = vmatpush.msra.mxu0 1.0
    %145 = vmatpush.msra.mxu0 1.0
    %146 = vmatmul.f32.gmra.mxu0 %v128
    %v147 = vpop.f32.mrf.mxu0
    %v148 = vadd.f32 0.0, %v147
    %149 = vdwg.mxu0
    %vm150 = vcmask 7168
    %v151 = vsel %vm150, %v148, 0.0
    %152 = vadd.xlane.f32.xlu0 %v151
    %v153 = vpop.xlane.xlu0 %152
    %v154 = vrot.slane %v153, 4
    %v155 = vadd.f32 %v153, %v154
    %v156 = vrot.slane %v155, 2
    %v157 = vadd.f32 %v155, %v156
    %v158 = vrot.slane %v157, 1
    %v159 = vadd.f32 %v157, %v158
    %s160 = vtos %v159
    %v161 = vrcp.pop 8.0
    %v162 = vmul.f32 8.0, %v161
    %v163 = vsub.f32 1.0, %v162
    %v164 = vmul.f32 %v161, %v163
    %v165 = vadd.f32 %v161, %v164
    %vm166 = vweird.f32 %v161
    %v167 = vsel %vm166, %v161, %v165
    %s168 = vtos %v167
    %s169 = smul.f32 %s160, %s168
    %v170 = vstv %s169
    %v171 = vsub.f32 %v148, %v170
    %v172 = vmul.f32 %v171, %v171
    %v173 = vsel %vm150, %v172, 0.0
    %174 = vadd.xlane.f32.xlu0 %v173
    %v175 = vpop.xlane.xlu0 %174
    %v176 = vrot.slane %v175, 4
    %v177 = vadd.f32 %v175, %v176
    %v178 = vrot.slane %v177, 2
    %v179 = vadd.f32 %v177, %v178
    %v180 = vrot.slane %v179, 1
    %v181 = vadd.f32 %v179, %v180
    %s182 = vtos %v181
    %v183 = vrcp.pop 7.0
    %v184 = vmul.f32 7.0, %v183
    %v185 = vsub.f32 1.0, %v184
    %v186 = vmul.f32 %v183, %v185
    %v187 = vadd.f32 %v183, %v186
    %vm188 = vweird.f32 %v183
    %v189 = vsel %vm188, %v183, %v187
    %s190 = vtos %v189
    %s191 = smul.f32 %s182, %s190
    %v192 = vstv %s191
    %v193 = vrsqrt.pop %v192
    %v194 = vmul.f32 %v193, %v192
    %v195 = vmul.f32 %v194, %v193
    %v196 = vmul.f32 0.5, %v195
    %v197 = vsub.f32 1.5, %v196
    %v198 = vmul.f32 %v193, %v197
    %vm199 = vweird.f32 %v192
    %vm200 = vweird.f32 %v193
    %vm201 = vmor %vm199, %vm200
    %v202 = vsel %vm201, %v193, %v198
    %s203 = vtos %v202
    %v204 = vstv %s203
    %v205 = vmul.f32 %v171, %v204
    %v206 = vld [vmem:[%s1] sm:$0xff]
    %v207 = vld [vmem:[%s2] sm:$0xff]
    %v208 = vld [vmem:[#allocation2] ss:$4 sm:$0xf]
    %s209 = scalar_lea.vmem [#allocation2], 1
    %v210 = vld [vmem:[%s209] ss:$4 sm:$0xf]
    %v211 = vld [vmem:[#allocation2 + $0x2] sm:$0x1]
    %v212 = vld [vmem:[#allocation2 + $0x3] sm:$0x1]
    %214 = vset.pattern.permute.xlu0 0
    %215 = vperm.xlu0 %214, %v205
    %v216 = vpop.permute.xlu0 %215
    %v219 = vperm.slane %v208, 0
    %v220 = vperm.slane %v208, 1
    %v221 = vperm.slane %v208, 2
    %v222 = vperm.slane %v208, 3
    %v227 = vmul.f32 %v216, %v219
    %v228 = vmul.f32 %v216, %v220
    %v229 = vmul.f32 %v216, %v221
    %v230 = vmul.f32 %v216, %v222
    %v232 = vperm.slane %v210, 0
    %v233 = vperm.slane %v210, 1
    %v234 = vperm.slane %v210, 2
    %v235 = vperm.slane %v210, 3
    %v240 = vadd.f32 %v227, %v232
    %v241 = vadd.f32 %v228, %v233
    %v242 = vadd.f32 %v229, %v234
    %v243 = vadd.f32 %v230, %v235
    %v244 = vpack.c.bf16 %v206, %v206
    %v245 = vld [vmem:[#allocation4] sm:$0xff]
    %v246 = vld [vmem:[#allocation4 + $0x8] sm:$0xff]
    %v247 = vld [vmem:[#allocation4 + $0x10] sm:$0xff]
    %v248 = vld [vmem:[#allocation4 + $0x18] sm:$0xff]
    %v249 = vld [vmem:[#allocation4 + $0x20] sm:$0xff]
    %v250 = vld [vmem:[#allocation4 + $0x28] sm:$0xff]
    %v251 = vld [vmem:[#allocation4 + $0x30] sm:$0xff]
    %v252 = vld [vmem:[#allocation4 + $0x38] sm:$0xff]
    %v253 = vld [vmem:[#allocation4 + $0x40] sm:$0xff]
    %v254 = vld [vmem:[#allocation4 + $0x48] sm:$0xff]
    %v255 = vld [vmem:[#allocation4 + $0x50] sm:$0xff]
    %v256 = vld [vmem:[#allocation4 + $0x58] sm:$0xff]
    %v257 = vld [vmem:[#allocation4 + $0x60] sm:$0xff]
    %v258 = vld [vmem:[#allocation4 + $0x68] sm:$0xff]
    %v259 = vld [vmem:[#allocation4 + $0x70] sm:$0xff]
    %v260 = vld [vmem:[#allocation4 + $0x78] sm:$0xff]
    %v261 = vld [vmem:[#allocation4 + $0x80] sm:$0xff]
    %v262 = vld [vmem:[#allocation4 + $0x88] sm:$0xff]
    %v263 = vld [vmem:[#allocation4 + $0x90] sm:$0xff]
    %v264 = vld [vmem:[#allocation4 + $0x98] sm:$0xff]
    %v265 = vld [vmem:[#allocation4 + $0xa0] sm:$0xff]
    %v266 = vld [vmem:[#allocation4 + $0xa8] sm:$0xff]
    %v267 = vld [vmem:[#allocation4 + $0xb0] sm:$0xff]
    %v268 = vld [vmem:[#allocation4 + $0xb8] sm:$0xff]
    %v269 = vld [vmem:[#allocation4 + $0xc0] sm:$0xff]
    %v270 = vld [vmem:[#allocation4 + $0xc8] sm:$0xff]
    %v271 = vld [vmem:[#allocation4 + $0xd0] sm:$0xff]
    %v272 = vld [vmem:[#allocation4 + $0xd8] sm:$0xff]
    %v273 = vld [vmem:[#allocation4 + $0xe0] sm:$0xff]
    %v274 = vld [vmem:[#allocation4 + $0xe8] sm:$0xff]
    %v275 = vld [vmem:[#allocation4 + $0xf0] sm:$0xff]
    %v276 = vld [vmem:[#allocation4 + $0xf8] sm:$0xff]
    %v309 = vunpack.c.l.b16 %v245
    %v310 = vunpack.c.h.b16 %v245
    %v311 = vunpack.c.l.b16 %v246
    %v312 = vunpack.c.h.b16 %v246
    %v313 = vunpack.c.l.b16 %v247
    %v314 = vunpack.c.h.b16 %v247
    %v315 = vunpack.c.l.b16 %v248
    %v316 = vunpack.c.h.b16 %v248
    %v317 = vunpack.c.l.b16 %v249
    %v318 = vunpack.c.h.b16 %v249
    %v319 = vunpack.c.l.b16 %v250
    %v320 = vunpack.c.h.b16 %v250
    %v321 = vunpack.c.l.b16 %v251
    %v322 = vunpack.c.h.b16 %v251
    %v323 = vunpack.c.l.b16 %v252
    %v324 = vunpack.c.h.b16 %v252
    %v325 = vunpack.c.l.b16 %v253
    %v326 = vunpack.c.h.b16 %v253
    %v327 = vunpack.c.l.b16 %v254
    %v328 = vunpack.c.h.b16 %v254
    %v329 = vunpack.c.l.b16 %v255
    %v330 = vunpack.c.h.b16 %v255
    %v331 = vunpack.c.l.b16 %v256
    %v332 = vunpack.c.h.b16 %v256
    %v333 = vunpack.c.l.b16 %v257
    %v334 = vunpack.c.h.b16 %v257
    %v335 = vunpack.c.l.b16 %v258
    %v336 = vunpack.c.h.b16 %v258
    %v337 = vunpack.c.l.b16 %v259
    %v338 = vunpack.c.h.b16 %v259
    %v339 = vunpack.c.l.b16 %v260
    %v340 = vunpack.c.h.b16 %v260
    %v341 = vunpack.c.l.b16 %v261
    %v342 = vunpack.c.h.b16 %v261
    %v343 = vunpack.c.l.b16 %v262
    %v344 = vunpack.c.h.b16 %v262
    %v345 = vunpack.c.l.b16 %v263
    %v346 = vunpack.c.h.b16 %v263
    %v347 = vunpack.c.l.b16 %v264
    %v348 = vunpack.c.h.b16 %v264
    %v349 = vunpack.c.l.b16 %v265
    %v350 = vunpack.c.h.b16 %v265
    %v351 = vunpack.c.l.b16 %v266
    %v352 = vunpack.c.h.b16 %v266
    %v353 = vunpack.c.l.b16 %v267
    %v354 = vunpack.c.h.b16 %v267
    %v355 = vunpack.c.l.b16 %v268
    %v356 = vunpack.c.h.b16 %v268
    %v357 = vunpack.c.l.b16 %v269
    %v358 = vunpack.c.h.b16 %v269
    %v359 = vunpack.c.l.b16 %v270
    %v360 = vunpack.c.h.b16 %v270
    %v361 = vunpack.c.l.b16 %v271
    %v362 = vunpack.c.h.b16 %v271
    %v363 = vunpack.c.l.b16 %v272
    %v364 = vunpack.c.h.b16 %v272
    %v365 = vunpack.c.l.b16 %v273
    %v366 = vunpack.c.h.b16 %v273
    %v367 = vunpack.c.l.b16 %v274
    %v368 = vunpack.c.h.b16 %v274
    %v369 = vunpack.c.l.b16 %v275
    %v370 = vunpack.c.h.b16 %v275
    %v371 = vunpack.c.l.b16 %v276
    %v372 = vunpack.c.h.b16 %v276
    %v373 = vpack.c.b16 %v313, %v309
    %v374 = vpack.c.b16 %v314, %v310
    %v375 = vpack.c.b16 %v315, %v311
    %v376 = vpack.c.b16 %v316, %v312
    %v377 = vpack.c.b16 %v321, %v317
    %v378 = vpack.c.b16 %v322, %v318
    %v379 = vpack.c.b16 %v323, %v319
    %v380 = vpack.c.b16 %v324, %v320
    %v381 = vpack.c.b16 %v329, %v325
    %v382 = vpack.c.b16 %v330, %v326
    %v383 = vpack.c.b16 %v331, %v327
    %v384 = vpack.c.b16 %v332, %v328
    %v385 = vpack.c.b16 %v337, %v333
    %v386 = vpack.c.b16 %v338, %v334
    %v387 = vpack.c.b16 %v339, %v335
    %v388 = vpack.c.b16 %v340, %v336
    %v389 = vpack.c.b16 %v345, %v341
    %v390 = vpack.c.b16 %v346, %v342
    %v391 = vpack.c.b16 %v347, %v343
    %v392 = vpack.c.b16 %v348, %v344
    %v393 = vpack.c.b16 %v353, %v349
    %v394 = vpack.c.b16 %v354, %v350
    %v395 = vpack.c.b16 %v355, %v351
    %v396 = vpack.c.b16 %v356, %v352
    %v397 = vpack.c.b16 %v361, %v357
    %v398 = vpack.c.b16 %v362, %v358
    %v399 = vpack.c.b16 %v363, %v359
    %v400 = vpack.c.b16 %v364, %v360
    %v401 = vpack.c.b16 %v369, %v365
    %v402 = vpack.c.b16 %v370, %v366
    %v403 = vpack.c.b16 %v371, %v367
    %v404 = vpack.c.b16 %v372, %v368
    %437 = vmatpush.bf16.msra.mxu0 %v401
    %438 = vmatpush.bf16.msra.mxu0 %v397
    %439 = vmatpush.bf16.msra.mxu0 %v393
    %440 = vmatpush.bf16.msra.mxu0 %v389
    %441 = vmatpush.bf16.msra.mxu0 %v385
    %442 = vmatpush.bf16.msra.mxu0 %v381
    %443 = vmatpush.bf16.msra.mxu0 %v377
    %444 = vmatpush.bf16.msra.mxu0 %v373
    %445 = vmatmul.bf16.gmra.mxu0 %v244
    %v446 = vpop.f32.mrf.mxu0
    %v447 = vadd.f32 0.0, %v446
    %v448 = vpop.f32.mrf.mxu0
    %449 = vdwg.mxu0
    %450 = vmatpush.bf16.msra.mxu0 %v402
    %451 = vmatpush.bf16.msra.mxu0 %v398
    %452 = vmatpush.bf16.msra.mxu0 %v394
    %453 = vmatpush.bf16.msra.mxu0 %v390
    %454 = vmatpush.bf16.msra.mxu0 %v386
    %455 = vmatpush.bf16.msra.mxu0 %v382
    %456 = vmatpush.bf16.msra.mxu0 %v378
    %457 = vmatpush.bf16.msra.mxu0 %v374
    %458 = vmatmul.bf16.gmra.mxu0 %v244
    %v459 = vpop.f32.mrf.mxu0
    %v460 = vadd.f32 0.0, %v459
    %v461 = vpop.f32.mrf.mxu0
    %462 = vdwg.mxu0
    %463 = vmatpush.bf16.msra.mxu0 %v403
    %464 = vmatpush.bf16.msra.mxu0 %v399
    %465 = vmatpush.bf16.msra.mxu0 %v395
    %466 = vmatpush.bf16.msra.mxu0 %v391
    %467 = vmatpush.bf16.msra.mxu0 %v387
    %468 = vmatpush.bf16.msra.mxu0 %v383
    %469 = vmatpush.bf16.msra.mxu0 %v379
    %470 = vmatpush.bf16.msra.mxu0 %v375
    %471 = vmatmul.bf16.gmra.mxu0 %v244
    %v472 = vpop.f32.mrf.mxu0
    %v473 = vadd.f32 0.0, %v472
    %v474 = vpop.f32.mrf.mxu0
    %475 = vdwg.mxu0
    %476 = vmatpush.bf16.msra.mxu0 %v404
    %477 = vmatpush.bf16.msra.mxu0 %v400
    %478 = vmatpush.bf16.msra.mxu0 %v396
    %479 = vmatpush.bf16.msra.mxu0 %v392
    %480 = vmatpush.bf16.msra.mxu0 %v388
    %481 = vmatpush.bf16.msra.mxu0 %v384
    %482 = vmatpush.bf16.msra.mxu0 %v380
    %483 = vmatpush.bf16.msra.mxu0 %v376
    %484 = vmatmul.bf16.gmra.mxu0 %v244
    %v485 = vpop.f32.mrf.mxu0
    %v486 = vadd.f32 0.0, %v485
    %v487 = vpop.f32.mrf.mxu0
    %488 = vdwg.mxu0
    %v489 = vadd.f32 %v240, %v447
    %v490 = vadd.f32 %v241, %v460
    %v491 = vadd.f32 %v242, %v473
    %v492 = vadd.f32 %v243, %v486
    %v493 = vxor.u32 %v489, 2147483648
    %v494 = vmul.f32 %v493, 1.442695
    %v495 = vpow.pop %v494
    %v496 = vadd.f32 %v495, 1.0
    %v497 = vrcp.pop %v496
    %v498 = vmul.f32 %v496, %v497
    %v499 = vsub.f32 1.0, %v498
    %v500 = vmul.f32 %v497, %v499
    %v501 = vadd.f32 %v497, %v500
    %vm502 = vweird.f32 %v496
    %vm503 = vweird.f32 %v497
    %vm504 = vmor %vm502, %vm503
    %v505 = vsel %vm504, %v497, %v501
    %v506 = vand.u32 2147483647, %v496
    %vm507 = vcmp.eq.f32.partialorder %v506, 8.507059e+37
    %v508 = vand.u32 %v496, 2147483648
    %v509 = vor.u32 1.1754944e-38, %v508
    %v510 = vsel %vm507, %v509, %v505
    %v511 = vmul.f32 1.0, %v510
    %v512 = vxor.u32 %v490, 2147483648
    %v513 = vmul.f32 %v512, 1.442695
    %v514 = vpow.pop %v513
    %v515 = vadd.f32 %v514, 1.0
    %v516 = vrcp.pop %v515
    %v517 = vmul.f32 %v515, %v516
    %v518 = vsub.f32 1.0, %v517
    %v519 = vmul.f32 %v516, %v518
    %v520 = vadd.f32 %v516, %v519
    %vm521 = vweird.f32 %v515
    %vm522 = vweird.f32 %v516
    %vm523 = vmor %vm521, %vm522
    %v524 = vsel %vm523, %v516, %v520
    %v525 = vand.u32 2147483647, %v515
    %vm526 = vcmp.eq.f32.partialorder %v525, 8.507059e+37
    %v527 = vand.u32 %v515, 2147483648
    %v528 = vor.u32 1.1754944e-38, %v527
    %v529 = vsel %vm526, %v528, %v524
    %v530 = vmul.f32 1.0, %v529
    %v531 = vtanh.pop %v491
    %v532 = vxor.u32 %v492, 2147483648
    %v533 = vmul.f32 %v532, 1.442695
    %v534 = vpow.pop %v533
    %v535 = vadd.f32 %v534, 1.0
    %v536 = vrcp.pop %v535
    %v537 = vmul.f32 %v535, %v536
    %v538 = vsub.f32 1.0, %v537
    %v539 = vmul.f32 %v536, %v538
    %v540 = vadd.f32 %v536, %v539
    %vm541 = vweird.f32 %v535
    %vm542 = vweird.f32 %v536
    %vm543 = vmor %vm541, %vm542
    %v544 = vsel %vm543, %v536, %v540
    %v545 = vand.u32 2147483647, %v535
    %vm546 = vcmp.eq.f32.partialorder %v545, 8.507059e+37
    %v547 = vand.u32 %v535, 2147483648
    %v548 = vor.u32 1.1754944e-38, %v547
    %v549 = vsel %vm546, %v548, %v544
    %v550 = vmul.f32 1.0, %v549
    %v551 = vmul.f32 %v530, %v207
    %v552 = vmul.f32 %v511, %v531
    %v553 = vadd.f32 %v551, %v552
    %v554 = vtanh.pop %v553
    %v555 = vmul.f32 %v550, %v554
    %v556 = vpack.c.bf16 %v553, %v553
    %v557 = vld [vmem:[#allocation6] sm:$0xf]
    %v558 = vld [vmem:[#allocation6 + $0x4] sm:$0xf]
    %v559 = vld [vmem:[#allocation6 + $0x8] sm:$0xf]
    %v560 = vld [vmem:[#allocation6 + $0xc] sm:$0xf]
    %v561 = vld [vmem:[#allocation6 + $0x10] sm:$0xf]
    %v562 = vld [vmem:[#allocation6 + $0x14] sm:$0xf]
    %v563 = vld [vmem:[#allocation6 + $0x18] sm:$0xf]
    %v564 = vld [vmem:[#allocation6 + $0x1c] sm:$0xf]
    %v565 = vld [vmem:[#allocation6 + $0x20] sm:$0xf]
    %v566 = vld [vmem:[#allocation6 + $0x24] sm:$0xf]
    %v567 = vld [vmem:[#allocation6 + $0x28] sm:$0xf]
    %v568 = vld [vmem:[#allocation6 + $0x2c] sm:$0xf]
    %v569 = vld [vmem:[#allocation6 + $0x30] sm:$0xf]
    %v570 = vld [vmem:[#allocation6 + $0x34] sm:$0xf]
    %v571 = vld [vmem:[#allocation6 + $0x38] sm:$0xf]
    %v572 = vld [vmem:[#allocation6 + $0x3c] sm:$0xf]
    %v573 = vperm.slane %v211, 0
    %v590 = vunpack.c.l.b16 %v557
    %v591 = vunpack.c.l.b16 %v558
    %v592 = vunpack.c.l.b16 %v559
    %v593 = vunpack.c.l.b16 %v560
    %v594 = vunpack.c.l.b16 %v561
    %v595 = vunpack.c.l.b16 %v562
    %v596 = vunpack.c.l.b16 %v563
    %v597 = vunpack.c.l.b16 %v564
    %v598 = vunpack.c.l.b16 %v565
    %v599 = vunpack.c.l.b16 %v566
    %v600 = vunpack.c.l.b16 %v567
    %v601 = vunpack.c.l.b16 %v568
    %v602 = vunpack.c.l.b16 %v569
    %v603 = vunpack.c.l.b16 %v570
    %v604 = vunpack.c.l.b16 %v571
    %v605 = vunpack.c.l.b16 %v572
    %v606 = vpack.c.b16 %v591, %v590
    %v607 = vpack.c.b16 %v593, %v592
    %v608 = vpack.c.b16 %v595, %v594
    %v609 = vpack.c.b16 %v597, %v596
    %v610 = vpack.c.b16 %v599, %v598
    %v611 = vpack.c.b16 %v601, %v600
    %v612 = vpack.c.b16 %v603, %v602
    %v613 = vpack.c.b16 %v605, %v604
    %622 = vmatpush.bf16.msra.mxu0 %v613
    %623 = vmatpush.bf16.msra.mxu0 %v612
    %624 = vmatpush.bf16.msra.mxu0 %v611
    %625 = vmatpush.bf16.msra.mxu0 %v610
    %626 = vmatpush.bf16.msra.mxu0 %v609
    %627 = vmatpush.bf16.msra.mxu0 %v608
    %628 = vmatpush.bf16.msra.mxu0 %v607
    %629 = vmatpush.bf16.msra.mxu0 %v606
    %630 = vmatmul.bf16.gmra.mxu0 %v556
    %v631 = vpop.f32.mrf.mxu0
    %v632 = vadd.f32 %v573, %v631
    %v633 = vpop.f32.mrf.mxu0
    %634 = vdwg.mxu0
    %v635 = vmax.f32 %v632, 0.0
    %v636 = vpack.c.bf16 %v635, %v635
    %v637 = vld [vmem:[#allocation7] sm:$0xf]
    %v638 = vld [vmem:[#allocation7 + $0x4] sm:$0xf]
    %v639 = vld [vmem:[#allocation7 + $0x8] sm:$0xf]
    %v640 = vld [vmem:[#allocation7 + $0xc] sm:$0xf]
    %v641 = vld [vmem:[#allocation7 + $0x10] sm:$0xf]
    %v642 = vld [vmem:[#allocation7 + $0x14] sm:$0xf]
    %v643 = vld [vmem:[#allocation7 + $0x18] sm:$0xf]
    %v644 = vld [vmem:[#allocation7 + $0x1c] sm:$0xf]
    %v645 = vld [vmem:[#allocation7 + $0x20] sm:$0xf]
    %v646 = vld [vmem:[#allocation7 + $0x24] sm:$0xf]
    %v647 = vld [vmem:[#allocation7 + $0x28] sm:$0xf]
    %v648 = vld [vmem:[#allocation7 + $0x2c] sm:$0xf]
    %v649 = vld [vmem:[#allocation7 + $0x30] sm:$0xf]
    %v650 = vld [vmem:[#allocation7 + $0x34] sm:$0xf]
    %v651 = vld [vmem:[#allocation7 + $0x38] sm:$0xf]
    %v652 = vld [vmem:[#allocation7 + $0x3c] sm:$0xf]
    %v653 = vperm.slane %v212, 0
    %v670 = vunpack.c.l.b16 %v637
    %v671 = vunpack.c.l.b16 %v638
    %v672 = vunpack.c.l.b16 %v639
    %v673 = vunpack.c.l.b16 %v640
    %v674 = vunpack.c.l.b16 %v641
    %v675 = vunpack.c.l.b16 %v642
    %v676 = vunpack.c.l.b16 %v643
    %v677 = vunpack.c.l.b16 %v644
    %v678 = vunpack.c.l.b16 %v645
    %v679 = vunpack.c.l.b16 %v646
    %v680 = vunpack.c.l.b16 %v647
    %v681 = vunpack.c.l.b16 %v648
    %v682 = vunpack.c.l.b16 %v649
    %v683 = vunpack.c.l.b16 %v650
    %v684 = vunpack.c.l.b16 %v651
    %v685 = vunpack.c.l.b16 %v652
    %v686 = vpack.c.b16 %v671, %v670
    %v687 = vpack.c.b16 %v673, %v672
    %v688 = vpack.c.b16 %v675, %v674
    %v689 = vpack.c.b16 %v677, %v676
    %v690 = vpack.c.b16 %v679, %v678
    %v691 = vpack.c.b16 %v681, %v680
    %v692 = vpack.c.b16 %v683, %v682
    %v693 = vpack.c.b16 %v685, %v684
    %702 = vmatpush.bf16.msra.mxu0 %v693
    %703 = vmatpush.bf16.msra.mxu0 %v692
    %704 = vmatpush.bf16.msra.mxu0 %v691
    %705 = vmatpush.bf16.msra.mxu0 %v690
    %706 = vmatpush.bf16.msra.mxu0 %v689
    %707 = vmatpush.bf16.msra.mxu0 %v688
    %708 = vmatpush.bf16.msra.mxu0 %v687
    %709 = vmatpush.bf16.msra.mxu0 %v686
    %710 = vmatmul.bf16.gmra.mxu0 %v636
    %v711 = vpop.f32.mrf.mxu0
    %v712 = vadd.f32 %v653, %v711
    %v713 = vpop.f32.mrf.mxu0
    %714 = vdwg.mxu0
    %vm715 = vcmp.gt.f32.partialorder %v712, 20.0
    %v716 = vmin.f32 %v712, 20.0
    %v717 = vmul.f32 %v716, 1.442695
    %v718 = vpow.pop %v717
    %v719 = vadd.f32 %v718, 1.0
    %v720 = vlog2.pop %v719
    %v721 = vmul.f32 %v720, 0.6931472
    %v722 = vmul.f32 -0.5, %v718
    %v723 = vadd.f32 %v722, 1.0
    %v724 = vmul.f32 %v723, %v718
    %v725 = vand.u32 2147483647, %v718
    %vm726 = vcmp.lt.f32.partialorder %v725, 0.0004427343
    %v727 = vsel %vm726, %v724, %v721
    %v728 = vsel %vm715, %v712, %v727
    %729 = vst [vmem:[%s7] sm:$0xff] %v728
    %730 = vst [vmem:[%s8] sm:$0xff] %v555
    %731 = vst [vmem:[%s9] sm:$0xff] %v553
    // Predicated region
    $region46: #{norm_lstmb_forward.1} parent=1 // pred_check
      _
    $region47: #{norm_lstmb_forward.1} parent=1 // pred_check_branch
      %733 = sbr.rel (0) target = $region49
    $region48: #{norm_lstmb_forward.1} parent=1 // pred_region
      _
    $region49: #{norm_lstmb_forward.1} parent=1 // pred_fallthru
      _
    // Predicated region
    $region50: #{norm_lstmb_forward.1} parent=1 // pred_check
      _
    $region51: #{norm_lstmb_forward.1} parent=1 // pred_check_branch
      %735 = sbr.rel (0) target = $region53
    $region52: #{norm_lstmb_forward.1} parent=1 // pred_region
      _
    $region53: #{norm_lstmb_forward.1} parent=1 // pred_fallthru
      _
    // Predicated region
    $region54: #{norm_lstmb_forward.1} parent=1 // pred_check
      _
    $region55: #{norm_lstmb_forward.1} parent=1 // pred_check_branch
      %737 = sbr.rel (0) target = $region57
    $region56: #{norm_lstmb_forward.1} parent=1 // pred_region
      _
    $region57: #{norm_lstmb_forward.1} parent=1 // pred_fallthru
      _
    // Predicated region
    $region58: #{norm_lstmb_forward.1} parent=1 // pred_check
      _
    $region59: #{norm_lstmb_forward.1} parent=1 // pred_check_branch
      %739 = sbr.rel (0) target = $region61
    $region60: #{norm_lstmb_forward.1} parent=1 // pred_region
      _
    $region61: #{norm_lstmb_forward.1} parent=1 // pred_fallthru
      _
    // Predicated region
    $region62: #{norm_lstmb_forward.1} parent=1 // pred_check
      _
    $region63: #{norm_lstmb_forward.1} parent=1 // pred_check_branch
      %741 = sbr.rel (0) target = $region65
    $region64: #{norm_lstmb_forward.1} parent=1 // pred_region
      _
    $region65: #{norm_lstmb_forward.1} parent=1 // pred_fallthru
      _
    // Predicated region
    $region66: #{norm_lstmb_forward.1} parent=1 // pred_check
      _
    $region67: #{norm_lstmb_forward.1} parent=1 // pred_check_branch
      %743 = sbr.rel (0) target = $region69
    $region68: #{norm_lstmb_forward.1} parent=1 // pred_region
      _
    $region69: #{norm_lstmb_forward.1} parent=1 // pred_fallthru
      _
    %744 = vsyncpa [#allocation3], 1
    %745 = vsyncpa [#allocation5], 1
    %746 = vsyncpa [#allocation8], 1

</llo_original>
